<compile_context>
chip_gen: v7x
topology: tpu7x:2x2x1
jax: 0.10.0
libtpu: 0.0.40
codegen_flags: <defaults>
</compile_context>

<pallas_src>
import math
from collections import OrderedDict

import jax
import jax.numpy as jnp
from jax.experimental import pallas as pl
from jax.experimental.pallas import tpu as pltpu


# ---------------------------------------------------------------------------
# Generation-aware VMEM budgeting (all trace-time Python).
# ---------------------------------------------------------------------------

_LANE_CANDIDATES = (2048, 1024, 512, 256, 128)


def _vmem_params():
    """Returns (tile_budget_bytes, vmem_limit_bytes) for this TPU generation."""
    vmem_cap = 128 * 1024 * 1024  # v5e/v6e physical; conservative fallback
    try:
        vmem_cap = int(pltpu.get_tpu_info().vmem_capacity_bytes)
    except Exception:
        pass
    # v5e/v6e (128 MiB physical) -> 28 MiB tile budget; v7x (64 MiB/TC) -> 16 MiB.
    budget = min(max(vmem_cap // 4, 12 << 20), 28 << 20)
    limit = min(budget + (8 << 20), (vmem_cap * 3) // 4)
    return budget, limit


def _choose_layout(total_elems, itemsize):
    """Pick a lane-dense 2D layout (rows, lane, pad_elems) for the flat tensor."""
    sublane = max(32 // itemsize, 8)  # 8 for f32, 16 for bf16, 32 for int8/fp8
    # Prefer large lane widths that also give fully packed sublanes.
    for lane in _LANE_CANDIDATES:
        if total_elems % lane == 0 and (total_elems // lane) % sublane == 0:
            return total_elems // lane, lane, 0
    for lane in _LANE_CANDIDATES:
        if total_elems % lane == 0:
            return total_elems // lane, lane, 0
    # Last resort: pad flat length up to a multiple of 128 so stores stay
    # lane-dense (unmasked vst) instead of keeping a <128 trailing dim.
    lane = 128
    padded = ((total_elems + lane - 1) // lane) * lane
    return padded // lane, lane, padded - total_elems


def _choose_row_tile(rows, lane, itemsize, n_inputs, budget_bytes):
    """Largest sublane-multiple row tile fitting (2n+2) double-buffered tiles."""
    sublane = max(32 // itemsize, 8)
    per_row_bytes = (2 * n_inputs + 2) * lane * itemsize
    max_tm = max(budget_bytes // per_row_bytes, 1)
    # v7x megacore: keep >= 2 grid steps when the tensor is big enough so the
    # "parallel" grid axis actually shards across both TensorCores.
    if rows >= 2 * sublane:
        half = max(((rows // 2) // sublane) * sublane, sublane)
        max_tm = min(max_tm, half)
    tm = min(rows, max_tm)
    if tm >= sublane:
        tm = (tm // sublane) * sublane  # packed sublanes; cdiv grid handles tail
    else:
        tm = min(rows, sublane)  # == rows (full dim) when rows < sublane
    return max(tm, 1)


# ---------------------------------------------------------------------------
# Kernel: weighted elementwise sum of the unique selected tiles (f32 accum).
# ---------------------------------------------------------------------------

def _make_weighted_sum_kernel(counts):
    counts = tuple(int(c) for c in counts)

    def kernel(*refs):
        out_ref = refs[-1]
        in_refs = refs[:-1]
        acc = in_refs[0][...].astype(jnp.float32)
        if counts[0] != 1:
            acc = acc * jnp.float32(counts[0])
        for r, c in zip(in_refs[1:], counts[1:]):
            x = r[...].astype(jnp.float32)
            if c != 1:
                x = x * jnp.float32(c)
            acc = acc + x
        out_ref[...] = acc.astype(out_ref.dtype)

    return kernel


def _weighted_sum_pallas(selected_flat, counts):
    """selected_flat: list of unique (rows, lane) arrays; counts: multiplicities."""
    n = len(selected_flat)
    rows, lane = selected_flat[0].shape
    dtype = selected_flat[0].dtype
    itemsize = jnp.dtype(dtype).itemsize

    budget, vmem_limit = _vmem_params()
    tm = _choose_row_tile(rows, lane, itemsize, n, budget)
    grid = (pl.cdiv(rows, tm),)

    in_specs = [pl.BlockSpec((tm, lane), lambda i: (i, 0)) for _ in range(n)]
    out_specs = pl.BlockSpec((tm, lane), lambda i: (i, 0))

    cost = pl.CostEstimate(
        flops=n * rows * lane,
        transcendentals=0,
        bytes_accessed=(n + 1) * rows * lane * itemsize,
    )

    return pl.pallas_call(
        _make_weighted_sum_kernel(counts),
        out_shape=jax.ShapeDtypeStruct((rows, lane), dtype),
        grid=grid,
        in_specs=in_specs,
        out_specs=out_specs,
        compiler_params=pltpu.CompilerParams(
            dimension_semantics=("parallel",),  # shard row tiles across v7x TCs
            vmem_limit_bytes=vmem_limit,
        ),
        cost_estimate=cost,
    )(*selected_flat)


# ---------------------------------------------------------------------------
# Module wrapper (mirrors the PyTorch PathSamplingInputChoice interface).
# ---------------------------------------------------------------------------

class PathSamplingInputChoice:
    """JAX/Pallas port of the PyTorch PathSamplingInputChoice module."""

    def __init__(self, n_candidates, n_chosen):
        self.n_candidates = n_candidates
        self.n_chosen = n_chosen
        self.sampled = None  # int or list of int

    def __len__(self):
        return self.n_candidates

    @property
    def mask(self):
        m = jnp.zeros((self.n_candidates,), dtype=bool)
        if isinstance(self.sampled, list):
            for t in self.sampled:
                m = m.at[t].set(True)
        elif self.sampled is not None:
            m = m.at[self.sampled].set(True)
        return m

    def __call__(self, input_tensors):
        assert self.sampled is not None, "set .sampled before calling forward"

        if not isinstance(self.sampled, list):
            # Single-index case: pure pass-through, zero work, no kernel.
            return input_tensors[self.sampled]

        # TODO(synk): PyTorch's sum([]) over an empty sampled list returns the
        # Python int 0; we require a non-empty selection instead.
        assert len(self.sampled) > 0, "sampled list must be non-empty"

        if len(self.sampled) == 1:
            # Degenerate but legal selection: pass-through, no HBM round trip.
            return input_tensors[self.sampled[0]]

        # Dedupe repeated indices at trace time: each unique candidate is read
        # from HBM once and scaled by its multiplicity inside the kernel.
        counts = OrderedDict()
        for t in self.sampled:
            counts[t] = counts.get(t, 0) + 1
        unique_idx = list(counts.keys())
        mult = [counts[t] for t in unique_idx]
        selected = [input_tensors[t] for t in unique_idx]

        orig_shape = selected[0].shape
        orig_dtype = selected[0].dtype
        total = math.prod(orig_shape)
        itemsize = jnp.dtype(orig_dtype).itemsize

        rows, lane, pad = _choose_layout(total, itemsize)

        if pad == 0:
            # Contiguous row-major reshape: free (no HBM copy).
            flat = [x.reshape(rows, lane) for x in selected]
        else:
            # TODO(synk): padding materializes one copy per unique input; only
            # hit for shapes whose element count is not a multiple of 128.
            flat = [jnp.pad(x.reshape(-1), (0, pad)).reshape(rows, lane)
                    for x in selected]

        out_flat = _weighted_sum_pallas(flat, mult)

        if pad == 0:
            return out_flat.reshape(orig_shape)
        return out_flat.reshape(-1)[:total].reshape(orig_shape)

    def __repr__(self):
        return (f'PathSamplingInputChoice(n_candidates={self.n_candidates}, '
                f'chosen={self.sampled})')


if __name__ == "__main__":
    key = jax.random.PRNGKey(0)
    n_candidates = 4
    B, C, H, W = 2, 4, 16, 16  # NCHW

    keys = jax.random.split(key, n_candidates)
    input_tensors = [
        jax.random.normal(k, (B, C, H, W), dtype=jnp.float32) for k in keys
    ]

    module = PathSamplingInputChoice(n_candidates=n_candidates, n_chosen=2)

    # Case 1: sampled is a list -> sum of selected candidates (Pallas kernel).
    module.sampled = [0, 2]
    out_list = module(input_tensors)
    jax.block_until_ready(out_list)
    ref_list = input_tensors[0] + input_tensors[2]
    assert out_list.shape == (B, C, H, W)
    assert jnp.allclose(out_list, ref_list, atol=1e-6), "list-sampled mismatch"

    # Case 2: list with duplicate index (deduped read, multiplicity-scaled sum).
    module.sampled = [1, 1, 3]
    out_dup = module(input_tensors)
    jax.block_until_ready(out_dup)
    ref_dup = input_tensors[1] + input_tensors[1] + input_tensors[3]
    assert jnp.allclose(out_dup, ref_dup, atol=1e-6), "dup-sampled mismatch"

    # Case 3: sampled is a single int -> pass-through (no kernel).
    module.sampled = 3
    out_int = module(input_tensors)
    jax.block_until_ready(out_int)
    assert jnp.allclose(out_int, input_tensors[3], atol=1e-6), "int-sampled mismatch"

    # Case 4: single-element list -> pass-through (no kernel).
    module.sampled = [2]
    out_one = module(input_tensors)
    jax.block_until_ready(out_one)
    assert jnp.allclose(out_one, input_tensors[2], atol=1e-6), "len-1 list mismatch"

    # Case 5: awkward shape (element count not a multiple of 128) exercises the
    # pad-to-lane-dense fallback and the slice-back path.
    odd_tensors = [
        jax.random.normal(k, (2, 3, 5, 7), dtype=jnp.float32)
        for k in jax.random.split(jax.random.PRNGKey(1), n_candidates)
    ]
    module.sampled = [0, 1, 3]
    out_odd = module(odd_tensors)
    jax.block_until_ready(out_odd)
    ref_odd = odd_tensors[0] + odd_tensors[1] + odd_tensors[3]
    assert out_odd.shape == (2, 3, 5, 7)
    assert jnp.allclose(out_odd, ref_odd, atol=1e-6), "odd-shape mismatch"

    print("KERNEL_OK")
</pallas_src>

<mosaic_0001>
module attributes {stable_mosaic.version = 11 : i64} {
  func.func @kernel(%arg0: i32, %arg1: memref<8x256xf32, #tpu.memory_space<vmem>>, %arg2: memref<8x256xf32, #tpu.memory_space<vmem>>, %arg3: memref<8x256xf32, #tpu.memory_space<vmem>>) attributes {dimension_semantics = [#tpu.dimension_semantics<parallel>], iteration_bounds = array<i64: 1>, scalar_prefetch = 0 : i64, scratch_operands = 0 : i64, tpu.core_type = #tpu.core_type<tc>, window_params = [{transform_indices = @transform_0, window_bounds = array<i64: 8, 256>}, {transform_indices = @transform_1, window_bounds = array<i64: 8, 256>}, {transform_indices = @transform_2, window_bounds = array<i64: 8, 256>}]} {
    %c0 = arith.constant 0 : index
    %c0_0 = arith.constant 0 : index
    %0 = vector.load %arg1[%c0, %c0_0] : memref<8x256xf32, #tpu.memory_space<vmem>>, vector<8x256xf32>
    %c0_1 = arith.constant 0 : index
    %c0_2 = arith.constant 0 : index
    %1 = vector.load %arg2[%c0_1, %c0_2] : memref<8x256xf32, #tpu.memory_space<vmem>>, vector<8x256xf32>
    %2 = arith.addf %0, %1 : vector<8x256xf32>
    %c0_3 = arith.constant 0 : index
    %c0_4 = arith.constant 0 : index
    %3 = vector.load %arg3[%c0_3, %c0_4] : memref<8x256xf32, #tpu.memory_space<vmem>>, vector<8x256xf32>
    tpu.vector_store %arg3[%c0_3, %c0_4], %2 {strides = array<i32>} : memref<8x256xf32, #tpu.memory_space<vmem>>, vector<8x256xf32>,
    return
  }
  func.func @transform_0(%arg0: i32) -> (i32, i32) {
    %c0_i32 = arith.constant 0 : i32
    %c0_i32_0 = arith.constant 0 : i32
    return %arg0, %c0_i32 : i32, i32
  }
  func.func @transform_1(%arg0: i32) -> (i32, i32) {
    %c0_i32 = arith.constant 0 : i32
    %c0_i32_0 = arith.constant 0 : i32
    return %arg0, %c0_i32 : i32, i32
  }
  func.func @transform_2(%arg0: i32) -> (i32, i32) {
    %c0_i32 = arith.constant 0 : i32
    %c0_i32_0 = arith.constant 0 : i32
    return %arg0, %c0_i32 : i32, i32
  }
}

</mosaic_0001>

<llo_original>
// kernel: tpu_custom_call.1
$region0: #{tpu_custom_call.1}
  #allocation0 [shape = 'u32[]', space=smem, size = 0x4, offset = 0x4, fixed_abs, tag = 'smem constant byte address 0x4 - core index']
  #allocation1 [shape = 'u32[144,128]{1,0:T(1,128)}', space=vmem, size = 0x12000, scoped, tag = 'internal scratch']
  %s0 = inlined_call_operand.hbm [shape: f32[8,256], index: 0, kind: input, shape index: {}]
  %s1 = inlined_call_operand.hbm [shape: f32[8,256], index: 1, kind: input, shape index: {}]
  %s2 = inlined_call_operand.hbm [shape: f32[8,256], index: 2, kind: output, shape index: {}]
  %s3 = sld [smem:[#allocation0]]
  $region26: #{tpu_custom_call.1} parent=0
    _
  %s5 = ssub.s32 1, %s3
  %s6 = scalar_select 0, %s5, %s3
  $region1: #{tpu_custom_call.1} parent=0
    #allocation2 [shape = 'u8[8192]{0}', space=vmem, size = 0x2000, scoped, tag = 'input window, operand 0, single buffered']
    #allocation3 [shape = 's32[1]{0}', space=sflag, size = 0x4, scoped, tag = 'scoped memory for tpu_custom_call.1']
    #allocation4 [shape = 's32[1]{0}', space=sflag, size = 0x4, scoped, tag = 'scoped memory for tpu_custom_call.1']
    #allocation5 [shape = 'u8[8192]{0}', space=vmem, size = 0x2000, scoped, tag = 'input window, operand 1, single buffered']
    #allocation6 [shape = 's32[1]{0}', space=sflag, size = 0x4, scoped, tag = 'scoped memory for tpu_custom_call.1']
    #allocation7 [shape = 'u8[8192]{0}', space=vmem, size = 0x2000, scoped, tag = 'output window, operand 0, single buffered']
    %7 = vsyncpa [#allocation3], 0
    %8 = vsyncpa [#allocation6], 0
    %9 = vsyncpa [#allocation4], 0
    // Predicated region
    $region2: #{tpu_custom_call.1} parent=1 // pred_check
      _
    $region3: #{tpu_custom_call.1} parent=1 // pred_check_branch
      %11 = sbr.rel (0) target = $region5
    $region4: #{tpu_custom_call.1} parent=1 // pred_region
      %s13 = ssub.s32 256, 256
      %14 = vsyncadd [#allocation3], %s13
      %s16 = sshll.u32 [#allocation2], 4
      %s17 = int_to_ptr.vmem [resolvable:$true] %s16
      %19 = dma.hbm_to_vmem [thread:$0]  %s0, 256, %s17, [#allocation3]
    $region5: #{tpu_custom_call.1} parent=1 // pred_fallthru
      _
    // Predicated region
    $region6: #{tpu_custom_call.1} parent=1 // pred_check
      _
    $region7: #{tpu_custom_call.1} parent=1 // pred_check_branch
      %21 = sbr.rel (0) target = $region9
    $region8: #{tpu_custom_call.1} parent=1 // pred_region
      %s23 = ssub.s32 256, 256
      %24 = vsyncadd [#allocation6], %s23
      %s26 = sshll.u32 [#allocation5], 4
      %s27 = int_to_ptr.vmem [resolvable:$true] %s26
      %29 = dma.hbm_to_vmem [thread:$0]  %s1, 256, %s27, [#allocation6]
    $region9: #{tpu_custom_call.1} parent=1 // pred_fallthru
      _
    // Predicated region
    $region10: #{tpu_custom_call.1} parent=1 // pred_check
      _
    $region11: #{tpu_custom_call.1} parent=1 // pred_check_branch
      %31 = sbr.rel (0) target = $region13
    $region12: #{tpu_custom_call.1} parent=1 // pred_region
      %32 = dma.done [#allocation3], 256
    $region13: #{tpu_custom_call.1} parent=1 // pred_fallthru
      _
    // Predicated region
    $region14: #{tpu_custom_call.1} parent=1 // pred_check
      _
    $region15: #{tpu_custom_call.1} parent=1 // pred_check_branch
      %34 = sbr.rel (0) target = $region17
    $region16: #{tpu_custom_call.1} parent=1 // pred_region
      %35 = dma.done [#allocation6], 256
    $region17: #{tpu_custom_call.1} parent=1 // pred_fallthru
      _
    %v36 = vld [vmem:[#allocation2] sm:$0xff]
    %v37 = vld [vmem:[#allocation2 + $0x8] sm:$0xff]
    %v38 = vld [vmem:[#allocation5] sm:$0xff]
    %v39 = vld [vmem:[#allocation5 + $0x8] sm:$0xff]
    %v40 = vadd.f32 %v36, %v38
    %v41 = vadd.f32 %v37, %v39
    %42 = vst [vmem:[#allocation7] sm:$0xff] %v40
    %43 = vst [vmem:[#allocation7 + $0x8] sm:$0xff] %v41
    // Predicated region
    $region18: #{tpu_custom_call.1} parent=1 // pred_check
      _
    $region19: #{tpu_custom_call.1} parent=1 // pred_check_branch
      %45 = sbr.rel (0) target = $region21
    $region20: #{tpu_custom_call.1} parent=1 // pred_region
      %s47 = ssub.s32 256, 256
      %48 = vsyncadd [#allocation4], %s47
      %s50 = sshll.u32 [#allocation7], 4
      %s51 = int_to_ptr.vmem [resolvable:$true] %s50
      %53 = dma.vmem_to_hbm [thread:$0]  %s51, 256, %s2, [#allocation4]
    $region21: #{tpu_custom_call.1} parent=1 // pred_fallthru
      _
    // Predicated region
    $region22: #{tpu_custom_call.1} parent=1 // pred_check
      _
    $region23: #{tpu_custom_call.1} parent=1 // pred_check_branch
      %55 = sbr.rel (0) target = $region25
    $region24: #{tpu_custom_call.1} parent=1 // pred_region
      %56 = dma.done [#allocation4], 256
    $region25: #{tpu_custom_call.1} parent=1 // pred_fallthru
      _
    %57 = vsyncpa [#allocation3], 1
    %58 = vsyncpa [#allocation6], 1
    %59 = vsyncpa [#allocation4], 1

</llo_original>
